<compile_context>
chip_gen: v5e
topology: v5e:2x2
jax: 0.10.0
libtpu: 0.0.40
codegen_flags: <defaults>
</compile_context>

<pallas_src>
import jax
import jax.numpy as jnp
from jax.experimental import pallas as pl
from jax.experimental.pallas import tpu as pltpu

H1_PAD = 512   # 400 -> 512 (4*128 lanes)
H2_PAD = 384   # 300 -> 384 (3*128 lanes)


def _critic_kernel(s_ref, a_ref, w1s_ref, w1a_ref, b1_ref,
                   w2_ref, b2_ref, w3_ref, b3_ref, q_ref):
    # h1 = relu(state @ W1_s + action @ W1_a + b1)   (bf16 MXU, f32 accumulate)
    s = s_ref[...].astype(jnp.bfloat16)
    a = a_ref[...].astype(jnp.bfloat16)
    h1 = (jnp.dot(s, w1s_ref[...], preferred_element_type=jnp.float32)
          + jnp.dot(a, w1a_ref[...], preferred_element_type=jnp.float32)
          + b1_ref[...])
    h1 = jnp.maximum(h1, 0.0)

    # h2 = relu(h1 @ W2 + b2)
    h2 = jnp.dot(h1.astype(jnp.bfloat16), w2_ref[...],
                 preferred_element_type=jnp.float32) + b2_ref[...]
    h2 = jnp.maximum(h2, 0.0)

    # q = h2 @ W3 + b3  as VPU multiply + lane (XLU) reduction; W3 is [1, H2]
    q = jnp.sum(h2 * w3_ref[...], axis=-1, keepdims=True) + b3_ref[...]
    q_ref[...] = q.astype(q_ref.dtype)


def critic_forward(state, action, params):
    """state: [B, state_dim], action: [B, action_dim] -> q: [B, 1]."""
    w1s, w1a, b1, w2, b2, w3, b3 = params
    B, S = state.shape
    A = action.shape[1]

    vmem = pl.BlockSpec(memory_space=pltpu.MemorySpace.VMEM)
    flops = 2 * B * (S * H1_PAD + A * H1_PAD + H1_PAD * H2_PAD + H2_PAD)
    bytes_accessed = sum(int(x.size) * x.dtype.itemsize
                         for x in (state, action, *params)) + B * 4

    return pl.pallas_call(
        _critic_kernel,
        out_shape=jax.ShapeDtypeStruct((B, 1), jnp.float32),
        in_specs=[vmem] * 9,
        out_specs=vmem,
        cost_estimate=pl.CostEstimate(flops=flops, transcendentals=0,
                                      bytes_accessed=bytes_accessed),
    )(state, action, w1s, w1a, b1, w2, b2, w3, b3)


def init_critic_params(key, state_dim, action_dim):
    """PyTorch nn.Linear-style U(-1/sqrt(fan_in), 1/sqrt(fan_in)) init, then
    split l1 into state/action halves, zero-pad hidden widths to lane-aligned
    sizes, and cast MXU weights to bf16 (biases and W3 stay f32)."""
    def linear(k, fan_in, fan_out):
        kw, kb = jax.random.split(k)
        bound = float(fan_in) ** -0.5
        w = jax.random.uniform(kw, (fan_in, fan_out), jnp.float32, -bound, bound)
        b = jax.random.uniform(kb, (1, fan_out), jnp.float32, -bound, bound)
        return w, b

    k1, k2, k3 = jax.random.split(key, 3)
    w1, b1 = linear(k1, state_dim + action_dim, 400)
    w2, b2 = linear(k2, 400, 300)
    w3, b3 = linear(k3, 300, 1)

    # split l1 so the runtime concat is unnecessary
    w1s, w1a = w1[:state_dim], w1[state_dim:]

    pad1 = H1_PAD - 400
    pad2 = H2_PAD - 300
    w1s = jnp.pad(w1s, ((0, 0), (0, pad1)))
    w1a = jnp.pad(w1a, ((0, 0), (0, pad1)))
    b1 = jnp.pad(b1, ((0, 0), (0, pad1)))
    w2 = jnp.pad(w2, ((0, pad1), (0, pad2)))
    b2 = jnp.pad(b2, ((0, 0), (0, pad2)))
    w3 = jnp.pad(w3.T, ((0, 0), (0, pad2)))   # stored [1, H2_PAD] for VPU reduce

    return (w1s.astype(jnp.bfloat16), w1a.astype(jnp.bfloat16), b1,
            w2.astype(jnp.bfloat16), b2, w3, b3)


def critic_reference(state, action, params):
    w1s, w1a, b1, w2, b2, w3, b3 = params
    f32 = lambda x: x.astype(jnp.float32)
    h1 = jnp.maximum(state @ f32(w1s) + action @ f32(w1a) + b1, 0.0)
    h2 = jnp.maximum(h1 @ f32(w2) + b2, 0.0)
    return h2 @ f32(w3).T + b3


if __name__ == "__main__":
    state_dim, action_dim, batch = 24, 4, 8  # BipedalWalker-v2 sizes

    key = jax.random.PRNGKey(0)
    k_s, k_a, k_p = jax.random.split(key, 3)
    state = jax.random.normal(k_s, (batch, state_dim), jnp.float32)
    action = jax.random.uniform(k_a, (batch, action_dim), jnp.float32, -1.0, 1.0)
    params = init_critic_params(k_p, state_dim, action_dim)

    q = jax.jit(critic_forward)(state, action, params)
    jax.block_until_ready(q)

    q_ref = critic_reference(state, action, params)
    assert q.shape == (batch, 1), q.shape
    assert jnp.allclose(q, q_ref, atol=2e-2, rtol=2e-2), (q, q_ref)

    print("KERNEL_OK")
</pallas_src>

<mosaic_0001>
module attributes {stable_mosaic.version = 11 : i64} {
  func.func @_critic_kernel(%arg0: memref<8x24xf32, #tpu.memory_space<vmem>>, %arg1: memref<8x4xf32, #tpu.memory_space<vmem>>, %arg2: memref<24x512xbf16, #tpu.memory_space<vmem>>, %arg3: memref<4x512xbf16, #tpu.memory_space<vmem>>, %arg4: memref<1x512xf32, #tpu.memory_space<vmem>>, %arg5: memref<512x384xbf16, #tpu.memory_space<vmem>>, %arg6: memref<1x384xf32, #tpu.memory_space<vmem>>, %arg7: memref<1x384xf32, #tpu.memory_space<vmem>>, %arg8: memref<1x1xf32, #tpu.memory_space<vmem>>, %arg9: memref<8x1xf32, #tpu.memory_space<vmem>>) attributes {dimension_semantics = [], scalar_prefetch = 0 : i64, scratch_operands = 0 : i64, tpu.core_type = #tpu.core_type<tc>} {
    %c0 = arith.constant 0 : index
    %c0_0 = arith.constant 0 : index
    %0 = vector.load %arg0[%c0, %c0_0] : memref<8x24xf32, #tpu.memory_space<vmem>>, vector<8x24xf32>
    %1 = arith.truncf %0 : vector<8x24xf32> to vector<8x24xbf16>
    %c0_1 = arith.constant 0 : index
    %c0_2 = arith.constant 0 : index
    %2 = vector.load %arg1[%c0_1, %c0_2] : memref<8x4xf32, #tpu.memory_space<vmem>>, vector<8x4xf32>
    %3 = arith.truncf %2 : vector<8x4xf32> to vector<8x4xbf16>
    %c0_3 = arith.constant 0 : index
    %c0_4 = arith.constant 0 : index
    %4 = vector.load %arg2[%c0_3, %c0_4] : memref<24x512xbf16, #tpu.memory_space<vmem>>, vector<24x512xbf16>
    %cst = arith.constant dense<0.000000e+00> : vector<8x512xf32>
    %5 = tpu.matmul %1, %4, %cst {dimension_numbers = #tpu.dot_dimension_numbers<[1], [0], [0], [1], [0, 0, 1, 1], [], []>} : vector<8x24xbf16>, vector<24x512xbf16>, vector<8x512xf32> -> vector<8x512xf32>
    %c0_5 = arith.constant 0 : index
    %c0_6 = arith.constant 0 : index
    %6 = vector.load %arg3[%c0_5, %c0_6] : memref<4x512xbf16, #tpu.memory_space<vmem>>, vector<4x512xbf16>
    %cst_7 = arith.constant dense<0.000000e+00> : vector<8x512xf32>
    %7 = tpu.matmul %3, %6, %cst_7 {dimension_numbers = #tpu.dot_dimension_numbers<[1], [0], [0], [1], [0, 0, 1, 1], [], []>} : vector<8x4xbf16>, vector<4x512xbf16>, vector<8x512xf32> -> vector<8x512xf32>
    %8 = arith.addf %5, %7 : vector<8x512xf32>
    %c0_8 = arith.constant 0 : index
    %c0_9 = arith.constant 0 : index
    %9 = vector.load %arg4[%c0_8, %c0_9] : memref<1x512xf32, #tpu.memory_space<vmem>>, vector<1x512xf32>
    %10 = vector.broadcast %9 : vector<1x512xf32> to vector<8x512xf32>
    %11 = arith.addf %8, %10 : vector<8x512xf32>
    %cst_10 = arith.constant 0.000000e+00 : f32
    %12 = vector.broadcast %cst_10 : f32 to vector<8x512xf32>
    %13 = arith.maximumf %11, %12 : vector<8x512xf32>
    %14 = arith.truncf %13 : vector<8x512xf32> to vector<8x512xbf16>
    %c0_11 = arith.constant 0 : index
    %c0_12 = arith.constant 0 : index
    %15 = vector.load %arg5[%c0_11, %c0_12] : memref<512x384xbf16, #tpu.memory_space<vmem>>, vector<512x384xbf16>
    %cst_13 = arith.constant dense<0.000000e+00> : vector<8x384xf32>
    %16 = tpu.matmul %14, %15, %cst_13 {dimension_numbers = #tpu.dot_dimension_numbers<[1], [0], [0], [1], [0, 0, 1, 1], [], []>} : vector<8x512xbf16>, vector<512x384xbf16>, vector<8x384xf32> -> vector<8x384xf32>
    %c0_14 = arith.constant 0 : index
    %c0_15 = arith.constant 0 : index
    %17 = vector.load %arg6[%c0_14, %c0_15] : memref<1x384xf32, #tpu.memory_space<vmem>>, vector<1x384xf32>
    %18 = vector.broadcast %17 : vector<1x384xf32> to vector<8x384xf32>
    %19 = arith.addf %16, %18 : vector<8x384xf32>
    %cst_16 = arith.constant 0.000000e+00 : f32
    %20 = vector.broadcast %cst_16 : f32 to vector<8x384xf32>
    %21 = arith.maximumf %19, %20 : vector<8x384xf32>
    %c0_17 = arith.constant 0 : index
    %c0_18 = arith.constant 0 : index
    %22 = vector.load %arg7[%c0_17, %c0_18] : memref<1x384xf32, #tpu.memory_space<vmem>>, vector<1x384xf32>
    %23 = vector.broadcast %22 : vector<1x384xf32> to vector<8x384xf32>
    %24 = arith.mulf %21, %23 : vector<8x384xf32>
    %cst_19 = arith.constant dense<0.000000e+00> : vector<8xf32>
    %25 = vector.multi_reduction <add>, %24, %cst_19 [1] : vector<8x384xf32> to vector<8xf32>
    %26 = vector.shape_cast %25 : vector<8xf32> to vector<8x1xf32>
    %c0_20 = arith.constant 0 : index
    %c0_21 = arith.constant 0 : index
    %27 = vector.load %arg8[%c0_20, %c0_21] : memref<1x1xf32, #tpu.memory_space<vmem>>, vector<1x1xf32>
    %28 = vector.broadcast %27 : vector<1x1xf32> to vector<8x1xf32>
    %29 = arith.addf %26, %28 : vector<8x1xf32>
    %c0_22 = arith.constant 0 : index
    %c0_23 = arith.constant 0 : index
    %30 = vector.load %arg9[%c0_22, %c0_23] : memref<8x1xf32, #tpu.memory_space<vmem>>, vector<8x1xf32>
    tpu.vector_store %arg9[%c0_22, %c0_23], %29 {strides = array<i32>} : memref<8x1xf32, #tpu.memory_space<vmem>>, vector<8x1xf32>,
    return
  }
}

</mosaic_0001>

<llo_original>
// kernel: critic_forward.1
$region0: #{critic_forward.1}
  #allocation0 [shape = 'u32[]', space=smem, size = 0x4, offset = 0x4, fixed_abs, tag = 'smem constant byte address 0x4 - core index']
  #allocation1 [shape = 'u32[72,128]{1,0:T(1,128)}', space=vmem, size = 0x9000, scoped, tag = 'internal scratch']
  #allocation2 [shape = 'f32[1,1]{1,0:T(1,128)S(1)}', space=vmem, size = 0x200, scoped, tag = 'scoped memory for critic_forward.1']
  %s0 = inlined_call_operand.vmem [shape: f32[8,24], index: 0, kind: input, shape index: {}]
  %s1 = inlined_call_operand.vmem [shape: f32[8,4], index: 1, kind: input, shape index: {}]
  %s2 = inlined_call_operand.hbm [shape: bf16[24,512], index: 2, kind: input, shape index: {}]
  %s3 = inlined_call_operand.vmem [shape: bf16[4,512], index: 3, kind: input, shape index: {}]
  %s4 = inlined_call_operand.hbm [shape: f32[1,512], index: 4, kind: input, shape index: {}]
  %s5 = inlined_call_operand.hbm [shape: bf16[512,384], index: 5, kind: input, shape index: {}]
  %s6 = inlined_call_operand.vmem [shape: f32[1,384], index: 6, kind: input, shape index: {}]
  %s7 = inlined_call_operand.hbm [shape: f32[1,384], index: 7, kind: input, shape index: {}]
  %s8 = inlined_call_operand.<no memory space> [shape: f32[1,1], index: 8, kind: input, shape index: {}]
  %s9 = inlined_call_operand.vmem [shape: f32[8,1], index: 9, kind: output, shape index: {}]
  %s10 = sld [smem:[#allocation0]]
  $region62: #{critic_forward.1} parent=0
    _
  %s12 = ssub.s32 1, %s10
  %s13 = scalar_select 0, %s12, %s10
  %v14 = vstv %s8
  %15 = vst [vmem:[#allocation2] sm:$0x1] %v14
  $region1: #{critic_forward.1} parent=0
    #allocation3 [shape = 'u8[24576]{0}', space=vmem, size = 0x6000, scoped, tag = 'input window, operand 2, single buffered']
    #allocation4 [shape = 's32[1]{0}', space=sflag, size = 0x4, scoped, tag = 'scoped memory for critic_forward.1']
    #allocation5 [shape = 'u8[2048]{0}', space=vmem, size = 0x800, scoped, tag = 'input window, operand 4, single buffered']
    #allocation6 [shape = 's32[1]{0}', space=sflag, size = 0x4, scoped, tag = 'scoped memory for critic_forward.1']
    #allocation7 [shape = 'u8[393216]{0}', space=vmem, size = 0x60000, scoped, tag = 'input window, operand 5, single buffered']
    #allocation8 [shape = 'u8[1536]{0}', space=vmem, size = 0x800, scoped, tag = 'input window, operand 7, single buffered']
    #allocation9 [shape = 's32[1]{0}', space=sflag, size = 0x4, scoped, tag = 'scoped memory for critic_forward.1']
    %16 = vsyncpa [#allocation4], 0
    %17 = vsyncpa [#allocation6], 0
    %18 = vsyncpa [#allocation9], 0
    // Predicated region
    $region2: #{critic_forward.1} parent=1 // pred_check
      _
    $region3: #{critic_forward.1} parent=1 // pred_check_branch
      %20 = sbr.rel (0) target = $region5
    $region4: #{critic_forward.1} parent=1 // pred_region
      _
    $region5: #{critic_forward.1} parent=1 // pred_fallthru
      _
    // Predicated region
    $region6: #{critic_forward.1} parent=1 // pred_check
      _
    $region7: #{critic_forward.1} parent=1 // pred_check_branch
      %22 = sbr.rel (0) target = $region9
    $region8: #{critic_forward.1} parent=1 // pred_region
      _
    $region9: #{critic_forward.1} parent=1 // pred_fallthru
      _
    // Predicated region
    $region10: #{critic_forward.1} parent=1 // pred_check
      _
    $region11: #{critic_forward.1} parent=1 // pred_check_branch
      %24 = sbr.rel (0) target = $region13
    $region12: #{critic_forward.1} parent=1 // pred_region
      %26 = vsyncadd [#allocation4], 0
      %s27 = sshll.u32 %s2, 4
      %s28 = int_to_ptr.hbm [resolvable:$true] %s27
      %s29 = sshll.u32 [#allocation3], 4
      %s30 = int_to_ptr.vmem [resolvable:$true] %s29
      %35 = dma.hbm_to_vmem [thread:$0]  %s28, 768, %s30, [#allocation4], 256, 256, 16
    $region13: #{critic_forward.1} parent=1 // pred_fallthru
      _
    // Predicated region
    $region14: #{critic_forward.1} parent=1 // pred_check
      _
    $region15: #{critic_forward.1} parent=1 // pred_check_branch
      %37 = sbr.rel (0) target = $region17
    $region16: #{critic_forward.1} parent=1 // pred_region
      _
    $region17: #{critic_forward.1} parent=1 // pred_fallthru
      _
    // Predicated region
    $region18: #{critic_forward.1} parent=1 // pred_check
      _
    $region19: #{critic_forward.1} parent=1 // pred_check_branch
      %39 = sbr.rel (0) target = $region21
    $region20: #{critic_forward.1} parent=1 // pred_region
      %41 = vsyncadd [#allocation6], 0
      %s43 = sshll.u32 %s4, 4
      %s44 = int_to_ptr.hbm [resolvable:$true] %s43
      %s45 = sshll.u32 [#allocation5], 4
      %s46 = int_to_ptr.vmem [resolvable:$true] %s45
      %48 = dma.hbm_to_vmem [thread:$0]  %s44, 64, %s46, [#allocation6]
    $region21: #{critic_forward.1} parent=1 // pred_fallthru
      _
    // Predicated region
    $region22: #{critic_forward.1} parent=1 // pred_check
      _
    $region23: #{critic_forward.1} parent=1 // pred_check_branch
      %50 = sbr.rel (0) target = $region25
    $region24: #{critic_forward.1} parent=1 // pred_region
      %52 = vsyncadd [#allocation6], 0
      %s53 = sshll.u32 %s5, 4
      %s54 = int_to_ptr.hbm [resolvable:$true] %s53
      %s55 = sshll.u32 [#allocation7], 4
      %s56 = int_to_ptr.vmem [resolvable:$true] %s55
      %61 = dma.hbm_to_vmem [thread:$0]  %s54, 12288, %s56, [#allocation6], 192, 192, 12
    $region25: #{critic_forward.1} parent=1 // pred_fallthru
      _
    // Predicated region
    $region26: #{critic_forward.1} parent=1 // pred_check
      _
    $region27: #{critic_forward.1} parent=1 // pred_check_branch
      %63 = sbr.rel (0) target = $region29
    $region28: #{critic_forward.1} parent=1 // pred_region
      _
    $region29: #{critic_forward.1} parent=1 // pred_fallthru
      _
    // Predicated region
    $region30: #{critic_forward.1} parent=1 // pred_check
      _
    $region31: #{critic_forward.1} parent=1 // pred_check_branch
      %65 = sbr.rel (0) target = $region33
    $region32: #{critic_forward.1} parent=1 // pred_region
      %67 = vsyncadd [#allocation9], 0
      %s69 = sshll.u32 %s7, 4
      %s70 = int_to_ptr.hbm [resolvable:$true] %s69
      %s71 = sshll.u32 [#allocation8], 4
      %s72 = int_to_ptr.vmem [resolvable:$true] %s71
      %74 = dma.hbm_to_vmem [thread:$0]  %s70, 48, %s72, [#allocation9]
    $region33: #{critic_forward.1} parent=1 // pred_fallthru
      _
    // Predicated region
    $region34: #{critic_forward.1} parent=1 // pred_check
      _
    $region35: #{critic_forward.1} parent=1 // pred_check_branch
      %76 = sbr.rel (0) target = $region37
    $region36: #{critic_forward.1} parent=1 // pred_region
      _
    $region37: #{critic_forward.1} parent=1 // pred_fallthru
      _
    // Predicated region
    $region38: #{critic_forward.1} parent=1 // pred_check
      _
    $region39: #{critic_forward.1} parent=1 // pred_check_branch
      %78 = sbr.rel (0) target = $region41
    $region40: #{critic_forward.1} parent=1 // pred_region
      %80 = dma.done [#allocation4], 768
    $region41: #{critic_forward.1} parent=1 // pred_fallthru
      _
    // Predicated region
    $region42: #{critic_forward.1} parent=1 // pred_check
      _
    $region43: #{critic_forward.1} parent=1 // pred_check_branch
      %82 = sbr.rel (0) target = $region45
    $region44: #{critic_forward.1} parent=1 // pred_region
      %84 = dma.done [#allocation6], 64
    $region45: #{critic_forward.1} parent=1 // pred_fallthru
      _
    // Predicated region
    $region46: #{critic_forward.1} parent=1 // pred_check
      _
    $region47: #{critic_forward.1} parent=1 // pred_check_branch
      %86 = sbr.rel (0) target = $region49
    $region48: #{critic_forward.1} parent=1 // pred_region
      %88 = dma.done [#allocation6], 12288
    $region49: #{critic_forward.1} parent=1 // pred_fallthru
      _
    // Predicated region
    $region50: #{critic_forward.1} parent=1 // pred_check
      _
    $region51: #{critic_forward.1} parent=1 // pred_check_branch
      %90 = sbr.rel (0) target = $region53
    $region52: #{critic_forward.1} parent=1 // pred_region
      %92 = dma.done [#allocation9], 48
    $region53: #{critic_forward.1} parent=1 // pred_fallthru
      _
    %v94 = vld [vmem:[%s0] sm:$0xff]
    %v95 = vpack.c.bf16 %v94, %v94
    %v96 = vld [vmem:[%s1] sm:$0xff]
    %v97 = vpack.c.bf16 %v96, %v96
    %v98 = vld [vmem:[#allocation3] sm:$0xff]
    %v99 = vld [vmem:[#allocation3 + $0x8] sm:$0xff]
    %v100 = vld [vmem:[#allocation3 + $0x10] sm:$0xff]
    %v101 = vld [vmem:[#allocation3 + $0x18] sm:$0xff]
    %v102 = vld [vmem:[#allocation3 + $0x20] sm:$0xff]
    %v103 = vld [vmem:[#allocation3 + $0x28] sm:$0xff]
    %v104 = vld [vmem:[%s3] sm:$0xff]
    %106 = vst [vmem:[#allocation1] ss:$4 sm:$0xff] %v104
    %v107 = vld.sshfl [vmem:[#allocation1] sm:$0xff pattern:$0x73625140]
    %v108 = vld.sshfl [vmem:[#allocation1 + $0x8] sm:$0xff pattern:$0x73625140]
    %v109 = vld.sshfl [vmem:[#allocation1 + $0x10] sm:$0xff pattern:$0x73625140]
    %v110 = vld.sshfl [vmem:[#allocation1 + $0x18] sm:$0xff pattern:$0x73625140]
    %vm111 = vcmask 31744
    %v113 = vsel %vm111, %v97, 0
    %vm115 = vcmask 1041408
    %v116 = vsel %vm115, %v107, 0
    %v118 = vsel %vm115, %v108, 0
    %v120 = vsel %vm115, %v109, 0
    %v122 = vsel %vm115, %v110, 0
    %124 = vmatpush.bf16.msra.mxu0 0
    %125 = vmatpush.bf16.msra.mxu0 0
    %126 = vmatpush.bf16.msra.mxu0 0
    %127 = vmatpush.bf16.msra.mxu0 0
    %128 = vmatpush.bf16.msra.mxu0 0
    %129 = vmatpush.bf16.msra.mxu0 0
    %130 = vmatpush.bf16.msra.mxu0 0
    %131 = vmatpush.bf16.msra.mxu0 %v116
    %132 = vmatmul.bf16.gmra.mxu0 %v113
    %v133 = vpop.f32.mrf.mxu0
    %v134 = vadd.f32 0.0, %v133
    %v135 = vpop.f32.mrf.mxu0
    %136 = vdwg.mxu0
    %137 = vmatpush.bf16.msra.mxu0 0
    %138 = vmatpush.bf16.msra.mxu0 0
    %139 = vmatpush.bf16.msra.mxu0 0
    %140 = vmatpush.bf16.msra.mxu0 0
    %141 = vmatpush.bf16.msra.mxu0 0
    %142 = vmatpush.bf16.msra.mxu0 0
    %143 = vmatpush.bf16.msra.mxu0 0
    %144 = vmatpush.bf16.msra.mxu0 %v118
    %145 = vmatmul.bf16.gmra.mxu0 %v113
    %v146 = vpop.f32.mrf.mxu0
    %v147 = vadd.f32 0.0, %v146
    %v148 = vpop.f32.mrf.mxu0
    %149 = vdwg.mxu0
    %150 = vmatpush.bf16.msra.mxu0 0
    %151 = vmatpush.bf16.msra.mxu0 0
    %152 = vmatpush.bf16.msra.mxu0 0
    %153 = vmatpush.bf16.msra.mxu0 0
    %154 = vmatpush.bf16.msra.mxu0 0
    %155 = vmatpush.bf16.msra.mxu0 0
    %156 = vmatpush.bf16.msra.mxu0 0
    %157 = vmatpush.bf16.msra.mxu0 %v120
    %158 = vmatmul.bf16.gmra.mxu0 %v113
    %v159 = vpop.f32.mrf.mxu0
    %v160 = vadd.f32 0.0, %v159
    %v161 = vpop.f32.mrf.mxu0
    %162 = vdwg.mxu0
    %163 = vmatpush.bf16.msra.mxu0 0
    %164 = vmatpush.bf16.msra.mxu0 0
    %165 = vmatpush.bf16.msra.mxu0 0
    %166 = vmatpush.bf16.msra.mxu0 0
    %167 = vmatpush.bf16.msra.mxu0 0
    %168 = vmatpush.bf16.msra.mxu0 0
    %169 = vmatpush.bf16.msra.mxu0 0
    %170 = vmatpush.bf16.msra.mxu0 %v122
    %171 = vmatmul.bf16.gmra.mxu0 %v113
    %v172 = vpop.f32.mrf.mxu0
    %v173 = vadd.f32 0.0, %v172
    %v174 = vpop.f32.mrf.mxu0
    %175 = vdwg.mxu0
    %v182 = vunpack.c.l.b16 %v98
    %v183 = vunpack.c.h.b16 %v98
    %v184 = vunpack.c.l.b16 %v99
    %v185 = vunpack.c.h.b16 %v99
    %v186 = vunpack.c.l.b16 %v100
    %v187 = vunpack.c.h.b16 %v100
    %v188 = vunpack.c.l.b16 %v101
    %v189 = vunpack.c.h.b16 %v101
    %v190 = vunpack.c.l.b16 %v102
    %v191 = vunpack.c.h.b16 %v102
    %v192 = vunpack.c.l.b16 %v103
    %v193 = vunpack.c.h.b16 %v103
    %v194 = vpack.c.b16 %v186, %v182
    %v195 = vpack.c.b16 %v187, %v183
    %v196 = vpack.c.b16 %v188, %v184
    %v197 = vpack.c.b16 %v189, %v185
    %v198 = vpack.c.b16 %v190, %v190
    %v199 = vpack.c.b16 %v191, %v191
    %v200 = vpack.c.b16 %v192, %v192
    %v201 = vpack.c.b16 %v193, %v193
    %vm206 = vcmask 195584
    %v208 = vsel %vm206, %v95, 0
    %vm210 = vcmask 1043456
    %v212 = vsel %vm210, %v198, 0
    %v215 = vsel %vm210, %v199, 0
    %v218 = vsel %vm210, %v200, 0
    %v221 = vsel %vm210, %v201, 0
    %223 = vmatpush.bf16.msra.mxu0 0
    %224 = vmatpush.bf16.msra.mxu0 0
    %225 = vmatpush.bf16.msra.mxu0 0
    %226 = vmatpush.bf16.msra.mxu0 0
    %227 = vmatpush.bf16.msra.mxu0 0
    %228 = vmatpush.bf16.msra.mxu0 0
    %229 = vmatpush.bf16.msra.mxu0 %v212
    %230 = vmatpush.bf16.msra.mxu0 %v194
    %231 = vmatmul.bf16.gmra.mxu0 %v208
    %v232 = vpop.f32.mrf.mxu0
    %v233 = vadd.f32 %v134, %v232
    %v234 = vpop.f32.mrf.mxu0
    %235 = vdwg.mxu0
    %236 = vmatpush.bf16.msra.mxu0 0
    %237 = vmatpush.bf16.msra.mxu0 0
    %238 = vmatpush.bf16.msra.mxu0 0
    %239 = vmatpush.bf16.msra.mxu0 0
    %240 = vmatpush.bf16.msra.mxu0 0
    %241 = vmatpush.bf16.msra.mxu0 0
    %242 = vmatpush.bf16.msra.mxu0 %v215
    %243 = vmatpush.bf16.msra.mxu0 %v195
    %244 = vmatmul.bf16.gmra.mxu0 %v208
    %v245 = vpop.f32.mrf.mxu0
    %v246 = vadd.f32 %v147, %v245
    %v247 = vpop.f32.mrf.mxu0
    %248 = vdwg.mxu0
    %249 = vmatpush.bf16.msra.mxu0 0
    %250 = vmatpush.bf16.msra.mxu0 0
    %251 = vmatpush.bf16.msra.mxu0 0
    %252 = vmatpush.bf16.msra.mxu0 0
    %253 = vmatpush.bf16.msra.mxu0 0
    %254 = vmatpush.bf16.msra.mxu0 0
    %255 = vmatpush.bf16.msra.mxu0 %v218
    %256 = vmatpush.bf16.msra.mxu0 %v196
    %257 = vmatmul.bf16.gmra.mxu0 %v208
    %v258 = vpop.f32.mrf.mxu0
    %v259 = vadd.f32 %v160, %v258
    %v260 = vpop.f32.mrf.mxu0
    %261 = vdwg.mxu0
    %262 = vmatpush.bf16.msra.mxu0 0
    %263 = vmatpush.bf16.msra.mxu0 0
    %264 = vmatpush.bf16.msra.mxu0 0
    %265 = vmatpush.bf16.msra.mxu0 0
    %266 = vmatpush.bf16.msra.mxu0 0
    %267 = vmatpush.bf16.msra.mxu0 0
    %268 = vmatpush.bf16.msra.mxu0 %v221
    %269 = vmatpush.bf16.msra.mxu0 %v197
    %270 = vmatmul.bf16.gmra.mxu0 %v208
    %v271 = vpop.f32.mrf.mxu0
    %v272 = vadd.f32 %v173, %v271
    %v273 = vpop.f32.mrf.mxu0
    %274 = vdwg.mxu0
    %v275 = vld [vmem:[#allocation5] sm:$0xf]
    %v277 = vperm.slane %v275, 0
    %v278 = vperm.slane %v275, 1
    %v279 = vperm.slane %v275, 2
    %v280 = vperm.slane %v275, 3
    %v285 = vadd.f32 %v233, %v277
    %v286 = vadd.f32 %v246, %v278
    %v287 = vadd.f32 %v259, %v279
    %v288 = vadd.f32 %v272, %v280
    %v289 = vmax.f32 %v285, 0.0
    %v290 = vmax.f32 %v286, 0.0
    %v291 = vmax.f32 %v287, 0.0
    %v292 = vmax.f32 %v288, 0.0
    %v293 = vpack.c.bf16 %v289, %v289
    %v294 = vpack.c.bf16 %v290, %v290
    %v295 = vpack.c.bf16 %v291, %v291
    %v296 = vpack.c.bf16 %v292, %v292
    %v297 = vld [vmem:[#allocation7] sm:$0xff]
    %v298 = vld [vmem:[#allocation7 + $0x8] sm:$0xf]
    %v299 = vld [vmem:[#allocation7 + $0xc] sm:$0xff]
    %v300 = vld [vmem:[#allocation7 + $0x14] sm:$0xf]
    %v301 = vld [vmem:[#allocation7 + $0x18] sm:$0xff]
    %v302 = vld [vmem:[#allocation7 + $0x20] sm:$0xf]
    %v303 = vld [vmem:[#allocation7 + $0x24] sm:$0xff]
    %v304 = vld [vmem:[#allocation7 + $0x2c] sm:$0xf]
    %v305 = vld [vmem:[#allocation7 + $0x30] sm:$0xff]
    %v306 = vld [vmem:[#allocation7 + $0x38] sm:$0xf]
    %v307 = vld [vmem:[#allocation7 + $0x3c] sm:$0xff]
    %v308 = vld [vmem:[#allocation7 + $0x44] sm:$0xf]
    %v309 = vld [vmem:[#allocation7 + $0x48] sm:$0xff]
    %v310 = vld [vmem:[#allocation7 + $0x50] sm:$0xf]
    %v311 = vld [vmem:[#allocation7 + $0x54] sm:$0xff]
    %v312 = vld [vmem:[#allocation7 + $0x5c] sm:$0xf]
    %v313 = vld [vmem:[#allocation7 + $0x60] sm:$0xff]
    %v314 = vld [vmem:[#allocation7 + $0x68] sm:$0xf]
    %v315 = vld [vmem:[#allocation7 + $0x6c] sm:$0xff]
    %v316 = vld [vmem:[#allocation7 + $0x74] sm:$0xf]
    %v317 = vld [vmem:[#allocation7 + $0x78] sm:$0xff]
    %v318 = vld [vmem:[#allocation7 + $0x80] sm:$0xf]
    %v319 = vld [vmem:[#allocation7 + $0x84] sm:$0xff]
    %v320 = vld [vmem:[#allocation7 + $0x8c] sm:$0xf]
    %v321 = vld [vmem:[#allocation7 + $0x90] sm:$0xff]
    %v322 = vld [vmem:[#allocation7 + $0x98] sm:$0xf]
    %v323 = vld [vmem:[#allocation7 + $0x9c] sm:$0xff]
    %v324 = vld [vmem:[#allocation7 + $0xa4] sm:$0xf]
    %v325 = vld [vmem:[#allocation7 + $0xa8] sm:$0xff]
    %v326 = vld [vmem:[#allocation7 + $0xb0] sm:$0xf]
    %v327 = vld [vmem:[#allocation7 + $0xb4] sm:$0xff]
    %v328 = vld [vmem:[#allocation7 + $0xbc] sm:$0xf]
    %v329 = vld [vmem:[#allocation7 + $0xc0] sm:$0xff]
    %v330 = vld [vmem:[#allocation7 + $0xc8] sm:$0xf]
    %v331 = vld [vmem:[#allocation7 + $0xcc] sm:$0xff]
    %v332 = vld [vmem:[#allocation7 + $0xd4] sm:$0xf]
    %v333 = vld [vmem:[#allocation7 + $0xd8] sm:$0xff]
    %v334 = vld [vmem:[#allocation7 + $0xe0] sm:$0xf]
    %v335 = vld [vmem:[#allocation7 + $0xe4] sm:$0xff]
    %v336 = vld [vmem:[#allocation7 + $0xec] sm:$0xf]
    %v337 = vld [vmem:[#allocation7 + $0xf0] sm:$0xff]
    %v338 = vld [vmem:[#allocation7 + $0xf8] sm:$0xf]
    %v339 = vld [vmem:[#allocation7 + $0xfc] sm:$0xff]
    %v340 = vld [vmem:[#allocation7 + $0x104] sm:$0xf]
    %v341 = vld [vmem:[#allocation7 + $0x108] sm:$0xff]
    %v342 = vld [vmem:[#allocation7 + $0x110] sm:$0xf]
    %v343 = vld [vmem:[#allocation7 + $0x114] sm:$0xff]
    %v344 = vld [vmem:[#allocation7 + $0x11c] sm:$0xf]
    %v345 = vld [vmem:[#allocation7 + $0x120] sm:$0xff]
    %v346 = vld [vmem:[#allocation7 + $0x128] sm:$0xf]
    %v347 = vld [vmem:[#allocation7 + $0x12c] sm:$0xff]
    %v348 = vld [vmem:[#allocation7 + $0x134] sm:$0xf]
    %v349 = vld [vmem:[#allocation7 + $0x138] sm:$0xff]
    %v350 = vld [vmem:[#allocation7 + $0x140] sm:$0xf]
    %v351 = vld [vmem:[#allocation7 + $0x144] sm:$0xff]
    %v352 = vld [vmem:[#allocation7 + $0x14c] sm:$0xf]
    %v353 = vld [vmem:[#allocation7 + $0x150] sm:$0xff]
    %v354 = vld [vmem:[#allocation7 + $0x158] sm:$0xf]
    %v355 = vld [vmem:[#allocation7 + $0x15c] sm:$0xff]
    %v356 = vld [vmem:[#allocation7 + $0x164] sm:$0xf]
    %v357 = vld [vmem:[#allocation7 + $0x168] sm:$0xff]
    %v358 = vld [vmem:[#allocation7 + $0x170] sm:$0xf]
    %v359 = vld [vmem:[#allocation7 + $0x174] sm:$0xff]
    %v360 = vld [vmem:[#allocation7 + $0x17c] sm:$0xf]
    %v361 = vld [vmem:[#allocation7 + $0x180] sm:$0xff]
    %v362 = vld [vmem:[#allocation7 + $0x188] sm:$0xf]
    %v363 = vld [vmem:[#allocation7 + $0x18c] sm:$0xff]
    %v364 = vld [vmem:[#allocation7 + $0x194] sm:$0xf]
    %v365 = vld [vmem:[#allocation7 + $0x198] sm:$0xff]
    %v366 = vld [vmem:[#allocation7 + $0x1a0] sm:$0xf]
    %v367 = vld [vmem:[#allocation7 + $0x1a4] sm:$0xff]
    %v368 = vld [vmem:[#allocation7 + $0x1ac] sm:$0xf]
    %v369 = vld [vmem:[#allocation7 + $0x1b0] sm:$0xff]
    %v370 = vld [vmem:[#allocation7 + $0x1b8] sm:$0xf]
    %v371 = vld [vmem:[#allocation7 + $0x1bc] sm:$0xff]
    %v372 = vld [vmem:[#allocation7 + $0x1c4] sm:$0xf]
    %v373 = vld [vmem:[#allocation7 + $0x1c8] sm:$0xff]
    %v374 = vld [vmem:[#allocation7 + $0x1d0] sm:$0xf]
    %v375 = vld [vmem:[#allocation7 + $0x1d4] sm:$0xff]
    %v376 = vld [vmem:[#allocation7 + $0x1dc] sm:$0xf]
    %v377 = vld [vmem:[#allocation7 + $0x1e0] sm:$0xff]
    %v378 = vld [vmem:[#allocation7 + $0x1e8] sm:$0xf]
    %v379 = vld [vmem:[#allocation7 + $0x1ec] sm:$0xff]
    %v380 = vld [vmem:[#allocation7 + $0x1f4] sm:$0xf]
    %v381 = vld [vmem:[#allocation7 + $0x1f8] sm:$0xff]
    %v382 = vld [vmem:[#allocation7 + $0x200] sm:$0xf]
    %v383 = vld [vmem:[#allocation7 + $0x204] sm:$0xff]
    %v384 = vld [vmem:[#allocation7 + $0x20c] sm:$0xf]
    %v385 = vld [vmem:[#allocation7 + $0x210] sm:$0xff]
    %v386 = vld [vmem:[#allocation7 + $0x218] sm:$0xf]
    %v387 = vld [vmem:[#allocation7 + $0x21c] sm:$0xff]
    %v388 = vld [vmem:[#allocation7 + $0x224] sm:$0xf]
    %v389 = vld [vmem:[#allocation7 + $0x228] sm:$0xff]
    %v390 = vld [vmem:[#allocation7 + $0x230] sm:$0xf]
    %v391 = vld [vmem:[#allocation7 + $0x234] sm:$0xff]
    %v392 = vld [vmem:[#allocation7 + $0x23c] sm:$0xf]
    %v393 = vld [vmem:[#allocation7 + $0x240] sm:$0xff]
    %v394 = vld [vmem:[#allocation7 + $0x248] sm:$0xf]
    %v395 = vld [vmem:[#allocation7 + $0x24c] sm:$0xff]
    %v396 = vld [vmem:[#allocation7 + $0x254] sm:$0xf]
    %v397 = vld [vmem:[#allocation7 + $0x258] sm:$0xff]
    %v398 = vld [vmem:[#allocation7 + $0x260] sm:$0xf]
    %v399 = vld [vmem:[#allocation7 + $0x264] sm:$0xff]
    %v400 = vld [vmem:[#allocation7 + $0x26c] sm:$0xf]
    %v401 = vld [vmem:[#allocation7 + $0x270] sm:$0xff]
    %v402 = vld [vmem:[#allocation7 + $0x278] sm:$0xf]
    %v403 = vld [vmem:[#allocation7 + $0x27c] sm:$0xff]
    %v404 = vld [vmem:[#allocation7 + $0x284] sm:$0xf]
    %v405 = vld [vmem:[#allocation7 + $0x288] sm:$0xff]
    %v406 = vld [vmem:[#allocation7 + $0x290] sm:$0xf]
    %v407 = vld [vmem:[#allocation7 + $0x294] sm:$0xff]
    %v408 = vld [vmem:[#allocation7 + $0x29c] sm:$0xf]
    %v409 = vld [vmem:[#allocation7 + $0x2a0] sm:$0xff]
    %v410 = vld [vmem:[#allocation7 + $0x2a8] sm:$0xf]
    %v411 = vld [vmem:[#allocation7 + $0x2ac] sm:$0xff]
    %v412 = vld [vmem:[#allocation7 + $0x2b4] sm:$0xf]
    %v413 = vld [vmem:[#allocation7 + $0x2b8] sm:$0xff]
    %v414 = vld [vmem:[#allocation7 + $0x2c0] sm:$0xf]
    %v415 = vld [vmem:[#allocation7 + $0x2c4] sm:$0xff]
    %v416 = vld [vmem:[#allocation7 + $0x2cc] sm:$0xf]
    %v417 = vld [vmem:[#allocation7 + $0x2d0] sm:$0xff]
    %v418 = vld [vmem:[#allocation7 + $0x2d8] sm:$0xf]
    %v419 = vld [vmem:[#allocation7 + $0x2dc] sm:$0xff]
    %v420 = vld [vmem:[#allocation7 + $0x2e4] sm:$0xf]
    %v421 = vld [vmem:[#allocation7 + $0x2e8] sm:$0xff]
    %v422 = vld [vmem:[#allocation7 + $0x2f0] sm:$0xf]
    %v423 = vld [vmem:[#allocation7 + $0x2f4] sm:$0xff]
    %v424 = vld [vmem:[#allocation7 + $0x2fc] sm:$0xf]
    %v425 = vld [vmem:[%s6] sm:$0x7]
    %v427 = vperm.slane %v425, 0
    %v428 = vperm.slane %v425, 1
    %v429 = vperm.slane %v425, 2
    %v561 = vunpack.c.l.b16 %v297
    %v562 = vunpack.c.h.b16 %v297
    %v563 = vunpack.c.l.b16 %v298
    %v564 = vunpack.c.l.b16 %v299
    %v565 = vunpack.c.h.b16 %v299
    %v566 = vunpack.c.l.b16 %v300
    %v567 = vunpack.c.l.b16 %v301
    %v568 = vunpack.c.h.b16 %v301
    %v569 = vunpack.c.l.b16 %v302
    %v570 = vunpack.c.l.b16 %v303
    %v571 = vunpack.c.h.b16 %v303
    %v572 = vunpack.c.l.b16 %v304
    %v573 = vunpack.c.l.b16 %v305
    %v574 = vunpack.c.h.b16 %v305
    %v575 = vunpack.c.l.b16 %v306
    %v576 = vunpack.c.l.b16 %v307
    %v577 = vunpack.c.h.b16 %v307
    %v578 = vunpack.c.l.b16 %v308
    %v579 = vunpack.c.l.b16 %v309
    %v580 = vunpack.c.h.b16 %v309
    %v581 = vunpack.c.l.b16 %v310
    %v582 = vunpack.c.l.b16 %v311
    %v583 = vunpack.c.h.b16 %v311
    %v584 = vunpack.c.l.b16 %v312
    %v585 = vunpack.c.l.b16 %v313
    %v586 = vunpack.c.h.b16 %v313
    %v587 = vunpack.c.l.b16 %v314
    %v588 = vunpack.c.l.b16 %v315
    %v589 = vunpack.c.h.b16 %v315
    %v590 = vunpack.c.l.b16 %v316
    %v591 = vunpack.c.l.b16 %v317
    %v592 = vunpack.c.h.b16 %v317
    %v593 = vunpack.c.l.b16 %v318
    %v594 = vunpack.c.l.b16 %v319
    %v595 = vunpack.c.h.b16 %v319
    %v596 = vunpack.c.l.b16 %v320
    %v597 = vunpack.c.l.b16 %v321
    %v598 = vunpack.c.h.b16 %v321
    %v599 = vunpack.c.l.b16 %v322
    %v600 = vunpack.c.l.b16 %v323
    %v601 = vunpack.c.h.b16 %v323
    %v602 = vunpack.c.l.b16 %v324
    %v603 = vunpack.c.l.b16 %v325
    %v604 = vunpack.c.h.b16 %v325
    %v605 = vunpack.c.l.b16 %v326
    %v606 = vunpack.c.l.b16 %v327
    %v607 = vunpack.c.h.b16 %v327
    %v608 = vunpack.c.l.b16 %v328
    %v609 = vunpack.c.l.b16 %v329
    %v610 = vunpack.c.h.b16 %v329
    %v611 = vunpack.c.l.b16 %v330
    %v612 = vunpack.c.l.b16 %v331
    %v613 = vunpack.c.h.b16 %v331
    %v614 = vunpack.c.l.b16 %v332
    %v615 = vunpack.c.l.b16 %v333
    %v616 = vunpack.c.h.b16 %v333
    %v617 = vunpack.c.l.b16 %v334
    %v618 = vunpack.c.l.b16 %v335
    %v619 = vunpack.c.h.b16 %v335
    %v620 = vunpack.c.l.b16 %v336
    %v621 = vunpack.c.l.b16 %v337
    %v622 = vunpack.c.h.b16 %v337
    %v623 = vunpack.c.l.b16 %v338
    %v624 = vunpack.c.l.b16 %v339
    %v625 = vunpack.c.h.b16 %v339
    %v626 = vunpack.c.l.b16 %v340
    %v627 = vunpack.c.l.b16 %v341
    %v628 = vunpack.c.h.b16 %v341
    %v629 = vunpack.c.l.b16 %v342
    %v630 = vunpack.c.l.b16 %v343
    %v631 = vunpack.c.h.b16 %v343
    %v632 = vunpack.c.l.b16 %v344
    %v633 = vunpack.c.l.b16 %v345
    %v634 = vunpack.c.h.b16 %v345
    %v635 = vunpack.c.l.b16 %v346
    %v636 = vunpack.c.l.b16 %v347
    %v637 = vunpack.c.h.b16 %v347
    %v638 = vunpack.c.l.b16 %v348
    %v639 = vunpack.c.l.b16 %v349
    %v640 = vunpack.c.h.b16 %v349
    %v641 = vunpack.c.l.b16 %v350
    %v642 = vunpack.c.l.b16 %v351
    %v643 = vunpack.c.h.b16 %v351
    %v644 = vunpack.c.l.b16 %v352
    %v645 = vunpack.c.l.b16 %v353
    %v646 = vunpack.c.h.b16 %v353
    %v647 = vunpack.c.l.b16 %v354
    %v648 = vunpack.c.l.b16 %v355
    %v649 = vunpack.c.h.b16 %v355
    %v650 = vunpack.c.l.b16 %v356
    %v651 = vunpack.c.l.b16 %v357
    %v652 = vunpack.c.h.b16 %v357
    %v653 = vunpack.c.l.b16 %v358
    %v654 = vunpack.c.l.b16 %v359
    %v655 = vunpack.c.h.b16 %v359
    %v656 = vunpack.c.l.b16 %v360
    %v657 = vunpack.c.l.b16 %v361
    %v658 = vunpack.c.h.b16 %v361
    %v659 = vunpack.c.l.b16 %v362
    %v660 = vunpack.c.l.b16 %v363
    %v661 = vunpack.c.h.b16 %v363
    %v662 = vunpack.c.l.b16 %v364
    %v663 = vunpack.c.l.b16 %v365
    %v664 = vunpack.c.h.b16 %v365
    %v665 = vunpack.c.l.b16 %v366
    %v666 = vunpack.c.l.b16 %v367
    %v667 = vunpack.c.h.b16 %v367
    %v668 = vunpack.c.l.b16 %v368
    %v669 = vunpack.c.l.b16 %v369
    %v670 = vunpack.c.h.b16 %v369
    %v671 = vunpack.c.l.b16 %v370
    %v672 = vunpack.c.l.b16 %v371
    %v673 = vunpack.c.h.b16 %v371
    %v674 = vunpack.c.l.b16 %v372
    %v675 = vunpack.c.l.b16 %v373
    %v676 = vunpack.c.h.b16 %v373
    %v677 = vunpack.c.l.b16 %v374
    %v678 = vunpack.c.l.b16 %v375
    %v679 = vunpack.c.h.b16 %v375
    %v680 = vunpack.c.l.b16 %v376
    %v681 = vunpack.c.l.b16 %v377
    %v682 = vunpack.c.h.b16 %v377
    %v683 = vunpack.c.l.b16 %v378
    %v684 = vunpack.c.l.b16 %v379
    %v685 = vunpack.c.h.b16 %v379
    %v686 = vunpack.c.l.b16 %v380
    %v687 = vunpack.c.l.b16 %v381
    %v688 = vunpack.c.h.b16 %v381
    %v689 = vunpack.c.l.b16 %v382
    %v690 = vunpack.c.l.b16 %v383
    %v691 = vunpack.c.h.b16 %v383
    %v692 = vunpack.c.l.b16 %v384
    %v693 = vunpack.c.l.b16 %v385
    %v694 = vunpack.c.h.b16 %v385
    %v695 = vunpack.c.l.b16 %v386
    %v696 = vunpack.c.l.b16 %v387
    %v697 = vunpack.c.h.b16 %v387
    %v698 = vunpack.c.l.b16 %v388
    %v699 = vunpack.c.l.b16 %v389
    %v700 = vunpack.c.h.b16 %v389
    %v701 = vunpack.c.l.b16 %v390
    %v702 = vunpack.c.l.b16 %v391
    %v703 = vunpack.c.h.b16 %v391
    %v704 = vunpack.c.l.b16 %v392
    %v705 = vunpack.c.l.b16 %v393
    %v706 = vunpack.c.h.b16 %v393
    %v707 = vunpack.c.l.b16 %v394
    %v708 = vunpack.c.l.b16 %v395
    %v709 = vunpack.c.h.b16 %v395
    %v710 = vunpack.c.l.b16 %v396
    %v711 = vunpack.c.l.b16 %v397
    %v712 = vunpack.c.h.b16 %v397
    %v713 = vunpack.c.l.b16 %v398
    %v714 = vunpack.c.l.b16 %v399
    %v715 = vunpack.c.h.b16 %v399
    %v716 = vunpack.c.l.b16 %v400
    %v717 = vunpack.c.l.b16 %v401
    %v718 = vunpack.c.h.b16 %v401
    %v719 = vunpack.c.l.b16 %v402
    %v720 = vunpack.c.l.b16 %v403
    %v721 = vunpack.c.h.b16 %v403
    %v722 = vunpack.c.l.b16 %v404
    %v723 = vunpack.c.l.b16 %v405
    %v724 = vunpack.c.h.b16 %v405
    %v725 = vunpack.c.l.b16 %v406
    %v726 = vunpack.c.l.b16 %v407
    %v727 = vunpack.c.h.b16 %v407
    %v728 = vunpack.c.l.b16 %v408
    %v729 = vunpack.c.l.b16 %v409
    %v730 = vunpack.c.h.b16 %v409
    %v731 = vunpack.c.l.b16 %v410
    %v732 = vunpack.c.l.b16 %v411
    %v733 = vunpack.c.h.b16 %v411
    %v734 = vunpack.c.l.b16 %v412
    %v735 = vunpack.c.l.b16 %v413
    %v736 = vunpack.c.h.b16 %v413
    %v737 = vunpack.c.l.b16 %v414
    %v738 = vunpack.c.l.b16 %v415
    %v739 = vunpack.c.h.b16 %v415
    %v740 = vunpack.c.l.b16 %v416
    %v741 = vunpack.c.l.b16 %v417
    %v742 = vunpack.c.h.b16 %v417
    %v743 = vunpack.c.l.b16 %v418
    %v744 = vunpack.c.l.b16 %v419
    %v745 = vunpack.c.h.b16 %v419
    %v746 = vunpack.c.l.b16 %v420
    %v747 = vunpack.c.l.b16 %v421
    %v748 = vunpack.c.h.b16 %v421
    %v749 = vunpack.c.l.b16 %v422
    %v750 = vunpack.c.l.b16 %v423
    %v751 = vunpack.c.h.b16 %v423
    %v752 = vunpack.c.l.b16 %v424
    %v753 = vpack.c.b16 %v564, %v561
    %v754 = vpack.c.b16 %v565, %v562
    %v755 = vpack.c.b16 %v566, %v563
    %v756 = vpack.c.b16 %v570, %v567
    %v757 = vpack.c.b16 %v571, %v568
    %v758 = vpack.c.b16 %v572, %v569
    %v759 = vpack.c.b16 %v576, %v573
    %v760 = vpack.c.b16 %v577, %v574
    %v761 = vpack.c.b16 %v578, %v575
    %v762 = vpack.c.b16 %v582, %v579
    %v763 = vpack.c.b16 %v583, %v580
    %v764 = vpack.c.b16 %v584, %v581
    %v765 = vpack.c.b16 %v588, %v585
    %v766 = vpack.c.b16 %v589, %v586
    %v767 = vpack.c.b16 %v590, %v587
    %v768 = vpack.c.b16 %v594, %v591
    %v769 = vpack.c.b16 %v595, %v592
    %v770 = vpack.c.b16 %v596, %v593
    %v771 = vpack.c.b16 %v600, %v597
    %v772 = vpack.c.b16 %v601, %v598
    %v773 = vpack.c.b16 %v602, %v599
    %v774 = vpack.c.b16 %v606, %v603
    %v775 = vpack.c.b16 %v607, %v604
    %v776 = vpack.c.b16 %v608, %v605
    %v777 = vpack.c.b16 %v612, %v609
    %v778 = vpack.c.b16 %v613, %v610
    %v779 = vpack.c.b16 %v614, %v611
    %v780 = vpack.c.b16 %v618, %v615
    %v781 = vpack.c.b16 %v619, %v616
    %v782 = vpack.c.b16 %v620, %v617
    %v783 = vpack.c.b16 %v624, %v621
    %v784 = vpack.c.b16 %v625, %v622
    %v785 = vpack.c.b16 %v626, %v623
    %v786 = vpack.c.b16 %v630, %v627
    %v787 = vpack.c.b16 %v631, %v628
    %v788 = vpack.c.b16 %v632, %v629
    %v789 = vpack.c.b16 %v636, %v633
    %v790 = vpack.c.b16 %v637, %v634
    %v791 = vpack.c.b16 %v638, %v635
    %v792 = vpack.c.b16 %v642, %v639
    %v793 = vpack.c.b16 %v643, %v640
    %v794 = vpack.c.b16 %v644, %v641
    %v795 = vpack.c.b16 %v648, %v645
    %v796 = vpack.c.b16 %v649, %v646
    %v797 = vpack.c.b16 %v650, %v647
    %v798 = vpack.c.b16 %v654, %v651
    %v799 = vpack.c.b16 %v655, %v652
    %v800 = vpack.c.b16 %v656, %v653
    %v801 = vpack.c.b16 %v660, %v657
    %v802 = vpack.c.b16 %v661, %v658
    %v803 = vpack.c.b16 %v662, %v659
    %v804 = vpack.c.b16 %v666, %v663
    %v805 = vpack.c.b16 %v667, %v664
    %v806 = vpack.c.b16 %v668, %v665
    %v807 = vpack.c.b16 %v672, %v669
    %v808 = vpack.c.b16 %v673, %v670
    %v809 = vpack.c.b16 %v674, %v671
    %v810 = vpack.c.b16 %v678, %v675
    %v811 = vpack.c.b16 %v679, %v676
    %v812 = vpack.c.b16 %v680, %v677
    %v813 = vpack.c.b16 %v684, %v681
    %v814 = vpack.c.b16 %v685, %v682
    %v815 = vpack.c.b16 %v686, %v683
    %v816 = vpack.c.b16 %v690, %v687
    %v817 = vpack.c.b16 %v691, %v688
    %v818 = vpack.c.b16 %v692, %v689
    %v819 = vpack.c.b16 %v696, %v693
    %v820 = vpack.c.b16 %v697, %v694
    %v821 = vpack.c.b16 %v698, %v695
    %v822 = vpack.c.b16 %v702, %v699
    %v823 = vpack.c.b16 %v703, %v700
    %v824 = vpack.c.b16 %v704, %v701
    %v825 = vpack.c.b16 %v708, %v705
    %v826 = vpack.c.b16 %v709, %v706
    %v827 = vpack.c.b16 %v710, %v707
    %v828 = vpack.c.b16 %v714, %v711
    %v829 = vpack.c.b16 %v715, %v712
    %v830 = vpack.c.b16 %v716, %v713
    %v831 = vpack.c.b16 %v720, %v717
    %v832 = vpack.c.b16 %v721, %v718
    %v833 = vpack.c.b16 %v722, %v719
    %v834 = vpack.c.b16 %v726, %v723
    %v835 = vpack.c.b16 %v727, %v724
    %v836 = vpack.c.b16 %v728, %v725
    %v837 = vpack.c.b16 %v732, %v729
    %v838 = vpack.c.b16 %v733, %v730
    %v839 = vpack.c.b16 %v734, %v731
    %v840 = vpack.c.b16 %v738, %v735
    %v841 = vpack.c.b16 %v739, %v736
    %v842 = vpack.c.b16 %v740, %v737
    %v843 = vpack.c.b16 %v744, %v741
    %v844 = vpack.c.b16 %v745, %v742
    %v845 = vpack.c.b16 %v746, %v743
    %v846 = vpack.c.b16 %v750, %v747
    %v847 = vpack.c.b16 %v751, %v748
    %v848 = vpack.c.b16 %v752, %v749
    %945 = vmatpush.bf16.msra.mxu0 %v774
    %946 = vmatpush.bf16.msra.mxu0 %v771
    %947 = vmatpush.bf16.msra.mxu0 %v768
    %948 = vmatpush.bf16.msra.mxu0 %v765
    %949 = vmatpush.bf16.msra.mxu0 %v762
    %950 = vmatpush.bf16.msra.mxu0 %v759
    %951 = vmatpush.bf16.msra.mxu0 %v756
    %952 = vmatpush.bf16.msra.mxu0 %v753
    %953 = vmatmul.bf16.gmra.mxu0 %v293
    %v954 = vpop.f32.mrf.mxu0
    %v955 = vadd.f32 %v427, %v954
    %v956 = vpop.f32.mrf.mxu0
    %957 = vdwg.mxu0
    %958 = vmatpush.bf16.msra.mxu0 %v798
    %959 = vmatpush.bf16.msra.mxu0 %v795
    %960 = vmatpush.bf16.msra.mxu0 %v792
    %961 = vmatpush.bf16.msra.mxu0 %v789
    %962 = vmatpush.bf16.msra.mxu0 %v786
    %963 = vmatpush.bf16.msra.mxu0 %v783
    %964 = vmatpush.bf16.msra.mxu0 %v780
    %965 = vmatpush.bf16.msra.mxu0 %v777
    %966 = vmatmul.bf16.gmra.mxu0 %v294
    %v967 = vpop.f32.mrf.mxu0
    %v968 = vadd.f32 %v955, %v967
    %v969 = vpop.f32.mrf.mxu0
    %970 = vdwg.mxu0
    %971 = vmatpush.bf16.msra.mxu0 %v822
    %972 = vmatpush.bf16.msra.mxu0 %v819
    %973 = vmatpush.bf16.msra.mxu0 %v816
    %974 = vmatpush.bf16.msra.mxu0 %v813
    %975 = vmatpush.bf16.msra.mxu0 %v810
    %976 = vmatpush.bf16.msra.mxu0 %v807
    %977 = vmatpush.bf16.msra.mxu0 %v804
    %978 = vmatpush.bf16.msra.mxu0 %v801
    %979 = vmatmul.bf16.gmra.mxu0 %v295
    %v980 = vpop.f32.mrf.mxu0
    %v981 = vadd.f32 %v968, %v980
    %v982 = vpop.f32.mrf.mxu0
    %983 = vdwg.mxu0
    %984 = vmatpush.bf16.msra.mxu0 %v846
    %985 = vmatpush.bf16.msra.mxu0 %v843
    %986 = vmatpush.bf16.msra.mxu0 %v840
    %987 = vmatpush.bf16.msra.mxu0 %v837
    %988 = vmatpush.bf16.msra.mxu0 %v834
    %989 = vmatpush.bf16.msra.mxu0 %v831
    %990 = vmatpush.bf16.msra.mxu0 %v828
    %991 = vmatpush.bf16.msra.mxu0 %v825
    %992 = vmatmul.bf16.gmra.mxu0 %v296
    %v993 = vpop.f32.mrf.mxu0
    %v994 = vadd.f32 %v981, %v993
    %v995 = vpop.f32.mrf.mxu0
    %996 = vdwg.mxu0
    %997 = vmatpush.bf16.msra.mxu0 %v775
    %998 = vmatpush.bf16.msra.mxu0 %v772
    %999 = vmatpush.bf16.msra.mxu0 %v769
    %1000 = vmatpush.bf16.msra.mxu0 %v766
    %1001 = vmatpush.bf16.msra.mxu0 %v763
    %1002 = vmatpush.bf16.msra.mxu0 %v760
    %1003 = vmatpush.bf16.msra.mxu0 %v757
    %1004 = vmatpush.bf16.msra.mxu0 %v754
    %1005 = vmatmul.bf16.gmra.mxu0 %v293
    %v1006 = vpop.f32.mrf.mxu0
    %v1007 = vadd.f32 %v428, %v1006
    %v1008 = vpop.f32.mrf.mxu0
    %1009 = vdwg.mxu0
    %1010 = vmatpush.bf16.msra.mxu0 %v799
    %1011 = vmatpush.bf16.msra.mxu0 %v796
    %1012 = vmatpush.bf16.msra.mxu0 %v793
    %1013 = vmatpush.bf16.msra.mxu0 %v790
    %1014 = vmatpush.bf16.msra.mxu0 %v787
    %1015 = vmatpush.bf16.msra.mxu0 %v784
    %1016 = vmatpush.bf16.msra.mxu0 %v781
    %1017 = vmatpush.bf16.msra.mxu0 %v778
    %1018 = vmatmul.bf16.gmra.mxu0 %v294
    %v1019 = vpop.f32.mrf.mxu0
    %v1020 = vadd.f32 %v1007, %v1019
    %v1021 = vpop.f32.mrf.mxu0
    %1022 = vdwg.mxu0
    %1023 = vmatpush.bf16.msra.mxu0 %v823
    %1024 = vmatpush.bf16.msra.mxu0 %v820
    %1025 = vmatpush.bf16.msra.mxu0 %v817
    %1026 = vmatpush.bf16.msra.mxu0 %v814
    %1027 = vmatpush.bf16.msra.mxu0 %v811
    %1028 = vmatpush.bf16.msra.mxu0 %v808
    %1029 = vmatpush.bf16.msra.mxu0 %v805
    %1030 = vmatpush.bf16.msra.mxu0 %v802
    %1031 = vmatmul.bf16.gmra.mxu0 %v295
    %v1032 = vpop.f32.mrf.mxu0
    %v1033 = vadd.f32 %v1020, %v1032
    %v1034 = vpop.f32.mrf.mxu0
    %1035 = vdwg.mxu0
    %1036 = vmatpush.bf16.msra.mxu0 %v847
    %1037 = vmatpush.bf16.msra.mxu0 %v844
    %1038 = vmatpush.bf16.msra.mxu0 %v841
    %1039 = vmatpush.bf16.msra.mxu0 %v838
    %1040 = vmatpush.bf16.msra.mxu0 %v835
    %1041 = vmatpush.bf16.msra.mxu0 %v832
    %1042 = vmatpush.bf16.msra.mxu0 %v829
    %1043 = vmatpush.bf16.msra.mxu0 %v826
    %1044 = vmatmul.bf16.gmra.mxu0 %v296
    %v1045 = vpop.f32.mrf.mxu0
    %v1046 = vadd.f32 %v1033, %v1045
    %v1047 = vpop.f32.mrf.mxu0
    %1048 = vdwg.mxu0
    %1049 = vmatpush.bf16.msra.mxu0 %v776
    %1050 = vmatpush.bf16.msra.mxu0 %v773
    %1051 = vmatpush.bf16.msra.mxu0 %v770
    %1052 = vmatpush.bf16.msra.mxu0 %v767
    %1053 = vmatpush.bf16.msra.mxu0 %v764
    %1054 = vmatpush.bf16.msra.mxu0 %v761
    %1055 = vmatpush.bf16.msra.mxu0 %v758
    %1056 = vmatpush.bf16.msra.mxu0 %v755
    %1057 = vmatmul.bf16.gmra.mxu0 %v293
    %v1058 = vpop.f32.mrf.mxu0
    %v1059 = vadd.f32 %v429, %v1058
    %v1060 = vpop.f32.mrf.mxu0
    %1061 = vdwg.mxu0
    %1062 = vmatpush.bf16.msra.mxu0 %v800
    %1063 = vmatpush.bf16.msra.mxu0 %v797
    %1064 = vmatpush.bf16.msra.mxu0 %v794
    %1065 = vmatpush.bf16.msra.mxu0 %v791
    %1066 = vmatpush.bf16.msra.mxu0 %v788
    %1067 = vmatpush.bf16.msra.mxu0 %v785
    %1068 = vmatpush.bf16.msra.mxu0 %v782
    %1069 = vmatpush.bf16.msra.mxu0 %v779
    %1070 = vmatmul.bf16.gmra.mxu0 %v294
    %v1071 = vpop.f32.mrf.mxu0
    %v1072 = vadd.f32 %v1059, %v1071
    %v1073 = vpop.f32.mrf.mxu0
    %1074 = vdwg.mxu0
    %1075 = vmatpush.bf16.msra.mxu0 %v824
    %1076 = vmatpush.bf16.msra.mxu0 %v821
    %1077 = vmatpush.bf16.msra.mxu0 %v818
    %1078 = vmatpush.bf16.msra.mxu0 %v815
    %1079 = vmatpush.bf16.msra.mxu0 %v812
    %1080 = vmatpush.bf16.msra.mxu0 %v809
    %1081 = vmatpush.bf16.msra.mxu0 %v806
    %1082 = vmatpush.bf16.msra.mxu0 %v803
    %1083 = vmatmul.bf16.gmra.mxu0 %v295
    %v1084 = vpop.f32.mrf.mxu0
    %v1085 = vadd.f32 %v1072, %v1084
    %v1086 = vpop.f32.mrf.mxu0
    %1087 = vdwg.mxu0
    %1088 = vmatpush.bf16.msra.mxu0 %v848
    %1089 = vmatpush.bf16.msra.mxu0 %v845
    %1090 = vmatpush.bf16.msra.mxu0 %v842
    %1091 = vmatpush.bf16.msra.mxu0 %v839
    %1092 = vmatpush.bf16.msra.mxu0 %v836
    %1093 = vmatpush.bf16.msra.mxu0 %v833
    %1094 = vmatpush.bf16.msra.mxu0 %v830
    %1095 = vmatpush.bf16.msra.mxu0 %v827
    %1096 = vmatmul.bf16.gmra.mxu0 %v296
    %v1097 = vpop.f32.mrf.mxu0
    %v1098 = vadd.f32 %v1085, %v1097
    %v1099 = vpop.f32.mrf.mxu0
    %1100 = vdwg.mxu0
    %v1101 = vmax.f32 %v994, 0.0
    %v1102 = vmax.f32 %v1046, 0.0
    %v1103 = vmax.f32 %v1098, 0.0
    %v1104 = vld [vmem:[#allocation8] sm:$0x7]
    %v1106 = vperm.slane %v1104, 0
    %v1107 = vperm.slane %v1104, 1
    %v1108 = vperm.slane %v1104, 2
    %v1112 = vmul.f32 %v1101, %v1106
    %v1113 = vmul.f32 %v1102, %v1107
    %v1114 = vmul.f32 %v1103, %v1108
    %v1115 = vadd.f32 %v1112, %v1113
    %v1116 = vadd.f32 %v1115, %v1114
    %1117 = vadd.xlane.f32.xlu0 %v1116
    %v1118 = vpop.xlane.xlu0 %1117
    %v1119 = vld [vmem:[#allocation2] sm:$0x1]
    %v1121 = vperm.slane %v1119, 0
    %v1123 = vadd.f32 %v1118, %v1121
    %vm1124 = vcmask 7168
    %1125 = vst.msk [vmem:[%s9] sm:$0xff] %vm1124, %v1123
    // Predicated region
    $region54: #{critic_forward.1} parent=1 // pred_check
      _
    $region55: #{critic_forward.1} parent=1 // pred_check_branch
      %1127 = sbr.rel (0) target = $region57
    $region56: #{critic_forward.1} parent=1 // pred_region
      _
    $region57: #{critic_forward.1} parent=1 // pred_fallthru
      _
    // Predicated region
    $region58: #{critic_forward.1} parent=1 // pred_check
      _
    $region59: #{critic_forward.1} parent=1 // pred_check_branch
      %1129 = sbr.rel (0) target = $region61
    $region60: #{critic_forward.1} parent=1 // pred_region
      _
    $region61: #{critic_forward.1} parent=1 // pred_fallthru
      _
    %1130 = vsyncpa [#allocation4], 1
    %1131 = vsyncpa [#allocation6], 1
    %1132 = vsyncpa [#allocation9], 1

</llo_original>
